<compile_context>
chip_gen: v5e
topology: v5e:2x2
jax: 0.10.0
libtpu: 0.0.40
codegen_flags: <defaults>
</compile_context>

<pallas_src>
import jax
import jax.numpy as jnp
from jax.experimental import pallas as pl
from jax.experimental.pallas import tpu as pltpu

SUBLANE = 8                          # f32 sublane granularity
MAX_BATCH_TILE = 4096                # ~12-16 MiB VMEM with 128-lane rounding
VMEM_LIMIT_BYTES = 48 * 1024 * 1024  # < v7x 64 MiB physical, << v5e/v6e 128 MiB


def _round_up(n, m):
    return ((n + m - 1) // m) * m


def _mlp_kernel(x_ref, w1_ref, b1_ref, w2_ref, b2_ref, w3_ref, b3_ref, o_ref):
    # One batch tile per grid step; weights/biases are VMEM-resident blocks.
    x = x_ref[...]                                                  # (tb, in)
    h1 = jnp.dot(x, w1_ref[...], preferred_element_type=jnp.float32) + b1_ref[...]
    h1 = jnp.maximum(h1, 0.0)                                       # (tb, hid)
    h2 = jnp.dot(h1, w2_ref[...], preferred_element_type=jnp.float32) + b2_ref[...]
    h2 = jnp.maximum(h2, 0.0)                                       # (tb, hid)
    y = jnp.dot(h2, w3_ref[...], preferred_element_type=jnp.float32) + b3_ref[...]
    o_ref[...] = y.astype(o_ref.dtype)                              # (tb, out)


def simple_nn_forward(x, params, *, max_batch_tile=MAX_BATCH_TILE):
    """x: [B, in_size] float32.  params: dict of w1,b1,w2,b2,w3,b3
    (weights stored [fan_in, fan_out], biases [1, fan_out])."""
    w1, b1, w2, b2, w3, b3 = (params[k] for k in ("w1", "b1", "w2", "b2", "w3", "b3"))
    B, in_size = x.shape
    hid = w1.shape[1]
    out_size = w3.shape[1]

    # Batch tile: multiple of 8 sublanes, no host-side padding; Pallas clips
    # the ragged last block.
    tb = min(max_batch_tile, _round_up(B, SUBLANE))
    grid = (pl.cdiv(B, tb),)

    resident = lambda i: (0, 0)   # weights/biases stay in VMEM across steps
    cost = pl.CostEstimate(
        flops=2 * B * (in_size * hid + hid * hid + hid * out_size),
        transcendentals=0,
        bytes_accessed=4 * (B * (in_size + out_size)
                            + in_size * hid + hid
                            + hid * hid + hid
                            + hid * out_size + out_size),
    )

    out = pl.pallas_call(
        _mlp_kernel,
        out_shape=jax.ShapeDtypeStruct((B, out_size), jnp.float32),
        grid=grid,
        in_specs=[
            pl.BlockSpec((tb, in_size), lambda i: (i, 0)),   # x: tiled over batch
            pl.BlockSpec((in_size, hid), resident),          # w1
            pl.BlockSpec((1, hid), resident),                # b1
            pl.BlockSpec((hid, hid), resident),              # w2
            pl.BlockSpec((1, hid), resident),                # b2
            pl.BlockSpec((hid, out_size), resident),         # w3
            pl.BlockSpec((1, out_size), resident),           # b3
        ],
        out_specs=pl.BlockSpec((tb, out_size), lambda i: (i, 0)),
        compiler_params=pltpu.CompilerParams(
            dimension_semantics=("parallel",),               # 2 TCs on v7x
            vmem_limit_bytes=VMEM_LIMIT_BYTES),
        cost_estimate=cost,
    )(x, w1, b1, w2, b2, w3, b3)
    return out


def init_params(key, in_size, out_size, hid_size=30):
    """Deterministic synthetic init (uniform, PyTorch-Linear-like scaling)."""
    ks = jax.random.split(key, 6)

    def lin(kw, kb, fan_in, fan_out):
        bound = 1.0 / jnp.sqrt(jnp.float32(fan_in))
        w = jax.random.uniform(kw, (fan_in, fan_out), jnp.float32, -bound, bound)
        b = jax.random.uniform(kb, (1, fan_out), jnp.float32, -bound, bound)
        return w, b

    w1, b1 = lin(ks[0], ks[1], in_size, hid_size)
    w2, b2 = lin(ks[2], ks[3], hid_size, hid_size)
    w3, b3 = lin(ks[4], ks[5], hid_size, out_size)
    return dict(w1=w1, b1=b1, w2=w2, b2=b2, w3=w3, b3=b3)


def _reference(x, p):
    h1 = jnp.maximum(x @ p["w1"] + p["b1"], 0.0)
    h2 = jnp.maximum(h1 @ p["w2"] + p["b2"], 0.0)
    return h2 @ p["w3"] + p["b3"]


if __name__ == "__main__":
    key = jax.random.PRNGKey(0)
    k_x, k_p, k_x2, k_x3 = jax.random.split(key, 4)

    in_size, hid_size, out_size = 4, 30, 2
    params = init_params(k_p, in_size, out_size, hid_size)

    # Small batch: single grid step, unpadded narrow blocks.
    x = jax.random.normal(k_x, (8, in_size), jnp.float32)
    out = jax.block_until_ready(simple_nn_forward(x, params))
    ref = _reference(x, params)
    assert out.shape == (8, out_size)
    assert jnp.allclose(out, ref, atol=1e-5, rtol=1e-5)

    # Batch not a multiple of 8: single ragged block (OOB rows clipped on write).
    x_odd = jax.random.normal(k_x3, (13, in_size), jnp.float32)
    out_odd = jax.block_until_ready(simple_nn_forward(x_odd, params))
    assert out_odd.shape == (13, out_size)
    assert jnp.allclose(out_odd, _reference(x_odd, params), atol=1e-5, rtol=1e-5)

    # Multi-step grid with a ragged last block (600 = 2*256 + 88), no batch pad.
    xl = jax.random.normal(k_x2, (600, in_size), jnp.float32)
    out_l = jax.block_until_ready(simple_nn_forward(xl, params, max_batch_tile=256))
    ref_l = _reference(xl, params)
    assert out_l.shape == (600, out_size)
    assert jnp.allclose(out_l, ref_l, atol=1e-4, rtol=1e-4)

    # Default single-big-tile path on the same data.
    out_l2 = jax.block_until_ready(simple_nn_forward(xl, params))
    assert jnp.allclose(out_l2, ref_l, atol=1e-4, rtol=1e-4)

    print("KERNEL_OK")
</pallas_src>

<mosaic_0001>
module attributes {stable_mosaic.version = 11 : i64} {
  func.func @_mlp_kernel(%arg0: i32, %arg1: memref<8x4xf32, #tpu.memory_space<vmem>>, %arg2: memref<4x30xf32, #tpu.memory_space<vmem>>, %arg3: memref<1x30xf32, #tpu.memory_space<vmem>>, %arg4: memref<30x30xf32, #tpu.memory_space<vmem>>, %arg5: memref<1x30xf32, #tpu.memory_space<vmem>>, %arg6: memref<30x2xf32, #tpu.memory_space<vmem>>, %arg7: memref<1x2xf32, #tpu.memory_space<vmem>>, %arg8: memref<8x2xf32, #tpu.memory_space<vmem>>) attributes {dimension_semantics = [#tpu.dimension_semantics<parallel>], iteration_bounds = array<i64: 1>, scalar_prefetch = 0 : i64, scratch_operands = 0 : i64, tpu.core_type = #tpu.core_type<tc>, window_params = [{transform_indices = @transform_0, window_bounds = array<i64: 8, 4>}, {pipeline_mode = #tpu.pipeline_mode<synchronous>, transform_indices = @transform_1, window_bounds = array<i64: 4, 30>}, {pipeline_mode = #tpu.pipeline_mode<synchronous>, transform_indices = @transform_2, window_bounds = array<i64: 1, 30>}, {pipeline_mode = #tpu.pipeline_mode<synchronous>, transform_indices = @transform_3, window_bounds = array<i64: 30, 30>}, {pipeline_mode = #tpu.pipeline_mode<synchronous>, transform_indices = @transform_4, window_bounds = array<i64: 1, 30>}, {pipeline_mode = #tpu.pipeline_mode<synchronous>, transform_indices = @transform_5, window_bounds = array<i64: 30, 2>}, {pipeline_mode = #tpu.pipeline_mode<synchronous>, transform_indices = @transform_6, window_bounds = array<i64: 1, 2>}, {transform_indices = @transform_7, window_bounds = array<i64: 8, 2>}]} {
    %c0 = arith.constant 0 : index
    %c0_0 = arith.constant 0 : index
    %0 = vector.load %arg1[%c0, %c0_0] : memref<8x4xf32, #tpu.memory_space<vmem>>, vector<8x4xf32>
    %c0_1 = arith.constant 0 : index
    %c0_2 = arith.constant 0 : index
    %1 = vector.load %arg2[%c0_1, %c0_2] : memref<4x30xf32, #tpu.memory_space<vmem>>, vector<4x30xf32>
    %cst = arith.constant dense<0.000000e+00> : vector<8x30xf32>
    %2 = tpu.matmul %0, %1, %cst {dimension_numbers = #tpu.dot_dimension_numbers<[1], [0], [0], [1], [0, 0, 1, 1], [], []>} : vector<8x4xf32>, vector<4x30xf32>, vector<8x30xf32> -> vector<8x30xf32>
    %c0_3 = arith.constant 0 : index
    %c0_4 = arith.constant 0 : index
    %3 = vector.load %arg3[%c0_3, %c0_4] : memref<1x30xf32, #tpu.memory_space<vmem>>, vector<1x30xf32>
    %4 = vector.broadcast %3 : vector<1x30xf32> to vector<8x30xf32>
    %5 = arith.addf %2, %4 : vector<8x30xf32>
    %cst_5 = arith.constant 0.000000e+00 : f32
    %6 = vector.broadcast %cst_5 : f32 to vector<8x30xf32>
    %7 = arith.maximumf %5, %6 : vector<8x30xf32>
    %c0_6 = arith.constant 0 : index
    %c0_7 = arith.constant 0 : index
    %8 = vector.load %arg4[%c0_6, %c0_7] : memref<30x30xf32, #tpu.memory_space<vmem>>, vector<30x30xf32>
    %cst_8 = arith.constant dense<0.000000e+00> : vector<8x30xf32>
    %9 = tpu.matmul %7, %8, %cst_8 {dimension_numbers = #tpu.dot_dimension_numbers<[1], [0], [0], [1], [0, 0, 1, 1], [], []>} : vector<8x30xf32>, vector<30x30xf32>, vector<8x30xf32> -> vector<8x30xf32>
    %c0_9 = arith.constant 0 : index
    %c0_10 = arith.constant 0 : index
    %10 = vector.load %arg5[%c0_9, %c0_10] : memref<1x30xf32, #tpu.memory_space<vmem>>, vector<1x30xf32>
    %11 = vector.broadcast %10 : vector<1x30xf32> to vector<8x30xf32>
    %12 = arith.addf %9, %11 : vector<8x30xf32>
    %cst_11 = arith.constant 0.000000e+00 : f32
    %13 = vector.broadcast %cst_11 : f32 to vector<8x30xf32>
    %14 = arith.maximumf %12, %13 : vector<8x30xf32>
    %c0_12 = arith.constant 0 : index
    %c0_13 = arith.constant 0 : index
    %15 = vector.load %arg6[%c0_12, %c0_13] : memref<30x2xf32, #tpu.memory_space<vmem>>, vector<30x2xf32>
    %cst_14 = arith.constant dense<0.000000e+00> : vector<8x2xf32>
    %16 = tpu.matmul %14, %15, %cst_14 {dimension_numbers = #tpu.dot_dimension_numbers<[1], [0], [0], [1], [0, 0, 1, 1], [], []>} : vector<8x30xf32>, vector<30x2xf32>, vector<8x2xf32> -> vector<8x2xf32>
    %c0_15 = arith.constant 0 : index
    %c0_16 = arith.constant 0 : index
    %17 = vector.load %arg7[%c0_15, %c0_16] : memref<1x2xf32, #tpu.memory_space<vmem>>, vector<1x2xf32>
    %18 = vector.broadcast %17 : vector<1x2xf32> to vector<8x2xf32>
    %19 = arith.addf %16, %18 : vector<8x2xf32>
    %c0_17 = arith.constant 0 : index
    %c0_18 = arith.constant 0 : index
    %20 = vector.load %arg8[%c0_17, %c0_18] : memref<8x2xf32, #tpu.memory_space<vmem>>, vector<8x2xf32>
    tpu.vector_store %arg8[%c0_17, %c0_18], %19 {strides = array<i32>} : memref<8x2xf32, #tpu.memory_space<vmem>>, vector<8x2xf32>,
    return
  }
  func.func @transform_0(%arg0: i32) -> (i32, i32) {
    %c0_i32 = arith.constant 0 : i32
    %c0_i32_0 = arith.constant 0 : i32
    return %arg0, %c0_i32 : i32, i32
  }
  func.func @transform_1(%arg0: i32) -> (i32, i32) {
    %c0_i32 = arith.constant 0 : i32
    %c0_i32_0 = arith.constant 0 : i32
    %c0_i32_1 = arith.constant 0 : i32
    return %c0_i32, %c0_i32_0 : i32, i32
  }
  func.func @transform_2(%arg0: i32) -> (i32, i32) {
    %c0_i32 = arith.constant 0 : i32
    %c0_i32_0 = arith.constant 0 : i32
    %c0_i32_1 = arith.constant 0 : i32
    return %c0_i32, %c0_i32_0 : i32, i32
  }
  func.func @transform_3(%arg0: i32) -> (i32, i32) {
    %c0_i32 = arith.constant 0 : i32
    %c0_i32_0 = arith.constant 0 : i32
    %c0_i32_1 = arith.constant 0 : i32
    return %c0_i32, %c0_i32_0 : i32, i32
  }
  func.func @transform_4(%arg0: i32) -> (i32, i32) {
    %c0_i32 = arith.constant 0 : i32
    %c0_i32_0 = arith.constant 0 : i32
    %c0_i32_1 = arith.constant 0 : i32
    return %c0_i32, %c0_i32_0 : i32, i32
  }
  func.func @transform_5(%arg0: i32) -> (i32, i32) {
    %c0_i32 = arith.constant 0 : i32
    %c0_i32_0 = arith.constant 0 : i32
    %c0_i32_1 = arith.constant 0 : i32
    return %c0_i32, %c0_i32_0 : i32, i32
  }
  func.func @transform_6(%arg0: i32) -> (i32, i32) {
    %c0_i32 = arith.constant 0 : i32
    %c0_i32_0 = arith.constant 0 : i32
    %c0_i32_1 = arith.constant 0 : i32
    return %c0_i32, %c0_i32_0 : i32, i32
  }
  func.func @transform_7(%arg0: i32) -> (i32, i32) {
    %c0_i32 = arith.constant 0 : i32
    %c0_i32_0 = arith.constant 0 : i32
    return %arg0, %c0_i32 : i32, i32
  }
}

</mosaic_0001>

<llo_original>
// kernel: tpu_custom_call.1
$region0: #{tpu_custom_call.1}
  #allocation0 [shape = 'u32[]', space=smem, size = 0x4, offset = 0x4, fixed_abs, tag = 'smem constant byte address 0x4 - core index']
  #allocation1 [shape = 'u32[72,128]{1,0:T(1,128)}', space=vmem, size = 0x9000, scoped, tag = 'internal scratch']
  %s0 = inlined_call_operand.vmem [shape: f32[8,4], index: 0, kind: input, shape index: {}]
  %s1 = inlined_call_operand.vmem [shape: f32[4,30], index: 1, kind: input, shape index: {}]
  %s2 = inlined_call_operand.vmem [shape: f32[1,30], index: 2, kind: input, shape index: {}]
  %s3 = inlined_call_operand.vmem [shape: f32[30,30], index: 3, kind: input, shape index: {}]
  %s4 = inlined_call_operand.vmem [shape: f32[1,30], index: 4, kind: input, shape index: {}]
  %s5 = inlined_call_operand.vmem [shape: f32[30,2], index: 5, kind: input, shape index: {}]
  %s6 = inlined_call_operand.vmem [shape: f32[1,2], index: 6, kind: input, shape index: {}]
  %s7 = inlined_call_operand.vmem [shape: f32[8,2], index: 7, kind: output, shape index: {}]
  %s8 = sld [smem:[#allocation0]]
  $region38: #{tpu_custom_call.1} parent=0
    _
  %s10 = ssub.s32 1, %s8
  %s11 = scalar_select 0, %s10, %s8
  // Predicated region
  $region2: #{tpu_custom_call.1} parent=0 // pred_check
    _
  $region3: #{tpu_custom_call.1} parent=0 // pred_check_branch
    %13 = sbr.rel (0) target = $region5
  $region4: #{tpu_custom_call.1} parent=0 // pred_region
    _
  $region5: #{tpu_custom_call.1} parent=0 // pred_fallthru
    _
  // Predicated region
  $region6: #{tpu_custom_call.1} parent=0 // pred_check
    _
  $region7: #{tpu_custom_call.1} parent=0 // pred_check_branch
    %15 = sbr.rel (0) target = $region9
  $region8: #{tpu_custom_call.1} parent=0 // pred_region
    _
  $region9: #{tpu_custom_call.1} parent=0 // pred_fallthru
    _
  // Predicated region
  $region10: #{tpu_custom_call.1} parent=0 // pred_check
    _
  $region11: #{tpu_custom_call.1} parent=0 // pred_check_branch
    %17 = sbr.rel (0) target = $region13
  $region12: #{tpu_custom_call.1} parent=0 // pred_region
    _
  $region13: #{tpu_custom_call.1} parent=0 // pred_fallthru
    _
  // Predicated region
  $region14: #{tpu_custom_call.1} parent=0 // pred_check
    _
  $region15: #{tpu_custom_call.1} parent=0 // pred_check_branch
    %19 = sbr.rel (0) target = $region17
  $region16: #{tpu_custom_call.1} parent=0 // pred_region
    _
  $region17: #{tpu_custom_call.1} parent=0 // pred_fallthru
    _
  // Predicated region
  $region18: #{tpu_custom_call.1} parent=0 // pred_check
    _
  $region19: #{tpu_custom_call.1} parent=0 // pred_check_branch
    %21 = sbr.rel (0) target = $region21
  $region20: #{tpu_custom_call.1} parent=0 // pred_region
    _
  $region21: #{tpu_custom_call.1} parent=0 // pred_fallthru
    _
  // Predicated region
  $region22: #{tpu_custom_call.1} parent=0 // pred_check
    _
  $region23: #{tpu_custom_call.1} parent=0 // pred_check_branch
    %23 = sbr.rel (0) target = $region25
  $region24: #{tpu_custom_call.1} parent=0 // pred_region
    _
  $region25: #{tpu_custom_call.1} parent=0 // pred_fallthru
    _
  // Predicated region
  $region26: #{tpu_custom_call.1} parent=0 // pred_check
    _
  $region27: #{tpu_custom_call.1} parent=0 // pred_check_branch
    %25 = sbr.rel (0) target = $region29
  $region28: #{tpu_custom_call.1} parent=0 // pred_region
    _
  $region29: #{tpu_custom_call.1} parent=0 // pred_fallthru
    _
  %v26 = vld [vmem:[%s0] sm:$0xff]
  %v27 = vld [vmem:[%s1] sm:$0xf]
  %v28 = vld [vmem:[%s2] sm:$0x1]
  %v30 = vperm.slane %v28, 0
  %vm32 = vcmask 31744
  %v34 = vsel %vm32, %v26, 0
  %vm36 = vcmask 1043456
  %v38 = vsel %vm36, %v27, 0
  %40 = vmatpush.msra.mxu0 0.0
  %41 = vmatpush.msra.mxu0 0.0
  %42 = vmatpush.msra.mxu0 0.0
  %43 = vmatpush.msra.mxu0 0.0
  %44 = vmatpush.msra.mxu0 0.0
  %45 = vmatpush.msra.mxu0 0.0
  %46 = vmatpush.msra.mxu0 0.0
  %47 = vmatpush.msra.mxu0 0.0
  %48 = vmatpush.msra.mxu0 0.0
  %49 = vmatpush.msra.mxu0 0.0
  %50 = vmatpush.msra.mxu0 0.0
  %51 = vmatpush.msra.mxu0 0.0
  %52 = vmatpush.msra.mxu0 0.0
  %53 = vmatpush.msra.mxu0 0.0
  %54 = vmatpush.msra.mxu0 0.0
  %55 = vmatpush.msra.mxu0 %v38
  %56 = vmatmul.f32.gmra.mxu0 %v34
  %v57 = vpop.f32.mrf.mxu0
  %v58 = vadd.f32 %v30, %v57
  %59 = vdwg.mxu0
  %v60 = vmax.f32 %v58, 0.0
  %v61 = vld [vmem:[%s3] sm:$0xff]
  %v62 = vld [vmem:[%s3 + $0x8] sm:$0xff]
  %v63 = vld [vmem:[%s3 + $0x10] sm:$0xff]
  %v64 = vld [vmem:[%s3 + $0x18] sm:$0x3f]
  %v65 = vld [vmem:[%s4] sm:$0x1]
  %v67 = vperm.slane %v65, 0
  %vm69 = vcmask 244736
  %v71 = vsel %vm69, %v60, 0
  %vm73 = vcmask 1045504
  %v75 = vsel %vm73, %v64, 0
  %77 = vmatpush.msra.mxu0 0.0
  %78 = vmatpush.msra.mxu0 0.0
  %79 = vmatpush.msra.mxu0 0.0
  %80 = vmatpush.msra.mxu0 0.0
  %81 = vmatpush.msra.mxu0 0.0
  %82 = vmatpush.msra.mxu0 0.0
  %83 = vmatpush.msra.mxu0 0.0
  %84 = vmatpush.msra.mxu0 0.0
  %85 = vmatpush.msra.mxu0 0.0
  %86 = vmatpush.msra.mxu0 0.0
  %87 = vmatpush.msra.mxu0 0.0
  %88 = vmatpush.msra.mxu0 0.0
  %89 = vmatpush.msra.mxu0 %v75
  %90 = vmatpush.msra.mxu0 %v63
  %91 = vmatpush.msra.mxu0 %v62
  %92 = vmatpush.msra.mxu0 %v61
  %93 = vmatmul.f32.gmra.mxu0 %v71
  %v94 = vpop.f32.mrf.mxu0
  %v95 = vadd.f32 %v67, %v94
  %96 = vdwg.mxu0
  %v97 = vmax.f32 %v95, 0.0
  %v98 = vld [vmem:[%s5] sm:$0xff]
  %v99 = vld [vmem:[%s5 + $0x8] sm:$0xff]
  %v100 = vld [vmem:[%s5 + $0x10] sm:$0xff]
  %v101 = vld [vmem:[%s5 + $0x18] sm:$0x3f]
  %v102 = vld [vmem:[%s6] sm:$0x1]
  %v104 = vperm.slane %v102, 0
  %v107 = vsel %vm69, %v97, 0
  %v110 = vsel %vm73, %v101, 0
  %112 = vmatpush.msra.mxu0 0.0
  %113 = vmatpush.msra.mxu0 0.0
  %114 = vmatpush.msra.mxu0 0.0
  %115 = vmatpush.msra.mxu0 0.0
  %116 = vmatpush.msra.mxu0 0.0
  %117 = vmatpush.msra.mxu0 0.0
  %118 = vmatpush.msra.mxu0 0.0
  %119 = vmatpush.msra.mxu0 0.0
  %120 = vmatpush.msra.mxu0 0.0
  %121 = vmatpush.msra.mxu0 0.0
  %122 = vmatpush.msra.mxu0 0.0
  %123 = vmatpush.msra.mxu0 0.0
  %124 = vmatpush.msra.mxu0 %v110
  %125 = vmatpush.msra.mxu0 %v100
  %126 = vmatpush.msra.mxu0 %v99
  %127 = vmatpush.msra.mxu0 %v98
  %128 = vmatmul.f32.gmra.mxu0 %v107
  %v129 = vpop.f32.mrf.mxu0
  %v130 = vadd.f32 %v104, %v129
  %131 = vdwg.mxu0
  %vm132 = vcmask 15360
  %133 = vst.msk [vmem:[%s7] sm:$0xff] %vm132, %v130
  // Predicated region
  $region30: #{tpu_custom_call.1} parent=0 // pred_check
    _
  $region31: #{tpu_custom_call.1} parent=0 // pred_check_branch
    %135 = sbr.rel (0) target = $region33
  $region32: #{tpu_custom_call.1} parent=0 // pred_region
    _
  $region33: #{tpu_custom_call.1} parent=0 // pred_fallthru
    _
  // Predicated region
  $region34: #{tpu_custom_call.1} parent=0 // pred_check
    _
  $region35: #{tpu_custom_call.1} parent=0 // pred_check_branch
    %137 = sbr.rel (0) target = $region37
  $region36: #{tpu_custom_call.1} parent=0 // pred_region
    _
  $region37: #{tpu_custom_call.1} parent=0 // pred_fallthru
    _

</llo_original>
